<compile_context>
chip_gen: v6e
topology: v6e:2x2x1
jax: 0.10.0
libtpu: 0.0.40
codegen_flags: <defaults>
</compile_context>

<pallas_src>
import jax
import jax.numpy as jnp
from jax.experimental import pallas as pl
from jax.experimental.pallas import tpu as pltpu

STATE_DIM = 8
ACTION_DIM = 2
IN_DIM = STATE_DIM + ACTION_DIM          # 10, fused [state | action] input
H1 = 128
H2 = 64
HCAT = H1 + H2                           # 192 rows out of the fused first GEMM
LN_EPS = 1e-5
LANE = 128                               # batch maps to lanes in this layout
MAX_TILE_B = 2048                        # batch tile (lanes); ~3-4 MiB live per tile


def _round_up(x, m):
    return ((x + m - 1) // m) * m


def _choose_tiling(batch):
    """Pick (tile_b, b_pad): lane-multiple tiles, >=2 grid steps when possible."""
    b_pad = _round_up(max(batch, 1), LANE)
    n_lanes = b_pad // LANE
    max_lanes = MAX_TILE_B // LANE
    if n_lanes >= 2:
        # Split so the grid has >=2 steps (v7x megacore) while capping tile size.
        tile_lanes = min(max_lanes, -(-n_lanes // 2))
    else:
        tile_lanes = 1
    tile_b = tile_lanes * LANE
    b_pad = _round_up(b_pad, tile_b)
    return tile_b, b_pad


def _layernorm_fm(x, gamma, beta):
    """LayerNorm over the feature axis (axis 0) in feature-major layout.

    x: (F, tile_b); gamma/beta: (F, 1).  Feature reductions are cross-vreg VPU
    adds + one sublane reduce (no cross-lane XLU traffic).  var is computed as
    E[x^2] - mu^2 and clamped at 0 to guard against f32 cancellation.
    """
    mu = jnp.mean(x, axis=0, keepdims=True)                  # (1, tile_b)
    mean_sq = jnp.mean(x * x, axis=0, keepdims=True)
    var = jnp.maximum(mean_sq - mu * mu, 0.0)
    inv = jax.lax.rsqrt(var + LN_EPS)
    return (x - mu) * inv * gamma + beta


def critic_kernel(
    xT_ref,             # (IN_DIM, tile_b)  f32   [state | action]^T
    w_inT_ref,          # (HCAT, IN_DIM)    bf16  blockdiag(w1, wa)^T
    b_in_ref,           # (HCAT, 1)         f32   [b1 | ba]^T
    g1_ref, be1_ref,    # (H1, 1)           f32   LayerNorm(128) affine
    w2T_ref,            # (H2, H1)          bf16
    b2_ref,             # (H2, 1)           f32
    g2_ref, be2_ref,    # (H2, 1)           f32   LayerNorm(64) affine
    wq_ref,             # (H2, 1)           f32   q head as a per-feature column
    bq_ref,             # (1, 1)            f32
    out_ref,            # (1, tile_b)       f32   lane-dense q row
):
    x = xT_ref[...].astype(w_inT_ref.dtype)                  # (IN_DIM, tile_b)

    # Fused first layer: one MXU push yields [fc1(state) ; action_value(action)]
    # stacked along features (rows).  N = tile_b fills the MXU.
    h = jnp.dot(w_inT_ref[...], x,
                preferred_element_type=jnp.float32) + b_in_ref[...]
    sv = h[:H1, :]                                           # (128, tile_b)
    av = h[H1:, :]                                           # (64,  tile_b)

    # State branch: LayerNorm(128) -> relu -> fc2 -> LayerNorm(64)
    # (no relu after LN2, matching the PyTorch forward).
    sv = jnp.maximum(_layernorm_fm(sv, g1_ref[...], be1_ref[...]), 0.0)
    sv = jnp.dot(w2T_ref[...], sv.astype(w2T_ref.dtype),
                 preferred_element_type=jnp.float32) + b2_ref[...]
    sv = _layernorm_fm(sv, g2_ref[...], be2_ref[...])

    # Action branch: relu only.
    av = jnp.maximum(av, 0.0)

    # Merge -> relu -> q head (64 -> 1) as a per-feature multiply + feature sum.
    sav = jnp.maximum(sv + av, 0.0)                          # (64, tile_b)
    q = jnp.sum(sav * wq_ref[...], axis=0, keepdims=True) + bq_ref[...]
    out_ref[...] = q.astype(out_ref.dtype)                   # (1, tile_b), lane-dense


def prepare_params(params, matmul_dtype=jnp.bfloat16):
    """One-time weight preparation (run OUTSIDE the per-step forward).

    Builds the block-diagonal fused first-layer weight, transposes everything
    into feature-major layout and casts matmul weights to `matmul_dtype`.
    """
    w_in = jnp.zeros((HCAT, IN_DIM), jnp.float32)
    w_in = w_in.at[:H1, :STATE_DIM].set(params["w1"].T)
    w_in = w_in.at[H1:, STATE_DIM:].set(params["wa"].T)
    return {
        "w_inT": w_in.astype(matmul_dtype),                               # (HCAT, IN_DIM)
        "b_in": jnp.concatenate([params["b1"], params["ba"]], axis=1).T,  # (HCAT, 1)
        "g1": params["g1"].T, "be1": params["be1"].T,                     # (H1, 1)
        "w2T": params["w2"].T.astype(matmul_dtype),                       # (H2, H1)
        "b2": params["b2"].T,                                             # (H2, 1)
        "g2": params["g2"].T, "be2": params["be2"].T,                     # (H2, 1)
        "wq": params["wq"],                                               # (H2, 1)
        "bq": params["bq"],                                               # (1, 1)
    }


@jax.jit
def critic_forward(state, action, prep):
    B = state.shape[0]
    tile_b, b_pad = _choose_tiling(B)

    # Single feature-major input stream: [state | action]^T, batch in lanes.
    # Padded batch columns are zeros (per-column LN => no cross-column mixing).
    xT = jnp.concatenate([state, action], axis=1).astype(jnp.float32).T  # (IN_DIM, B)
    if b_pad != B:
        xT = jnp.pad(xT, ((0, 0), (0, b_pad - B)))

    args = (
        xT, prep["w_inT"], prep["b_in"],
        prep["g1"], prep["be1"],
        prep["w2T"], prep["b2"],
        prep["g2"], prep["be2"],
        prep["wq"], prep["bq"],
    )

    batch_map = lambda i: (0, i)
    const_map = lambda i: (0, 0)

    in_specs = [
        pl.BlockSpec((IN_DIM, tile_b), batch_map),   # x^T: tiled over batch lanes
        pl.BlockSpec((HCAT, IN_DIM), const_map),     # weights: VMEM-resident
        pl.BlockSpec((HCAT, 1), const_map),
        pl.BlockSpec((H1, 1), const_map),
        pl.BlockSpec((H1, 1), const_map),
        pl.BlockSpec((H2, H1), const_map),
        pl.BlockSpec((H2, 1), const_map),
        pl.BlockSpec((H2, 1), const_map),
        pl.BlockSpec((H2, 1), const_map),
        pl.BlockSpec((H2, 1), const_map),
        pl.BlockSpec((1, 1), const_map),
    ]
    out_specs = pl.BlockSpec((1, tile_b), batch_map)         # lane-dense q row

    out = pl.pallas_call(
        critic_kernel,
        out_shape=jax.ShapeDtypeStruct((1, b_pad), jnp.float32),
        grid_spec=pltpu.PrefetchScalarGridSpec(
            num_scalar_prefetch=0,
            grid=(b_pad // tile_b,),
            in_specs=in_specs,
            out_specs=out_specs,
        ),
        compiler_params=pltpu.CompilerParams(
            dimension_semantics=("parallel",),       # shard batch tiles across TCs (v7x)
            vmem_limit_bytes=32 * 1024 * 1024,
        ),
    )(*args)
    return out[0, :B].reshape(B, 1)


def init_params(key):
    """Deterministic init mirroring PyTorch nn.Linear / nn.LayerNorm defaults."""
    ks = jax.random.split(key, 8)

    def linear(kw, kb, fan_in, fan_out):
        bound = 1.0 / jnp.sqrt(float(fan_in))
        w = jax.random.uniform(kw, (fan_in, fan_out), jnp.float32, -bound, bound)
        b = jax.random.uniform(kb, (1, fan_out), jnp.float32, -bound, bound)
        return w, b

    w1, b1 = linear(ks[0], ks[1], STATE_DIM, H1)
    w2, b2 = linear(ks[2], ks[3], H1, H2)
    wa, ba = linear(ks[4], ks[5], ACTION_DIM, H2)
    wq, bq = linear(ks[6], ks[7], H2, 1)

    return {
        "w1": w1, "b1": b1,
        "g1": jnp.ones((1, H1), jnp.float32), "be1": jnp.zeros((1, H1), jnp.float32),
        "w2": w2, "b2": b2,
        "g2": jnp.ones((1, H2), jnp.float32), "be2": jnp.zeros((1, H2), jnp.float32),
        "wa": wa, "ba": ba,
        "wq": wq, "bq": bq,
    }


def reference_forward(state, action, p):
    """Pure f32 reference matching the PyTorch forward."""
    sv = state @ p["w1"] + p["b1"]
    mu = sv.mean(-1, keepdims=True)
    var = ((sv - mu) ** 2).mean(-1, keepdims=True)
    sv = (sv - mu) / jnp.sqrt(var + LN_EPS) * p["g1"] + p["be1"]
    sv = jnp.maximum(sv, 0.0)
    sv = sv @ p["w2"] + p["b2"]
    mu = sv.mean(-1, keepdims=True)
    var = ((sv - mu) ** 2).mean(-1, keepdims=True)
    sv = (sv - mu) / jnp.sqrt(var + LN_EPS) * p["g2"] + p["be2"]
    av = jnp.maximum(action @ p["wa"] + p["ba"], 0.0)
    sav = jnp.maximum(sv + av, 0.0)
    return sav @ p["wq"] + p["bq"]


# TODO(synk): the PyTorch module's Adam optimizer and checkpoint save/load have
# no kernel equivalent; only the forward pass is implemented here.

if __name__ == "__main__":
    key = jax.random.PRNGKey(0)
    kp, ks, ka = jax.random.split(key, 3)

    batch = 8
    params = init_params(kp)
    prep = prepare_params(params)                 # one-time weight prep (hoisted)
    state = jax.random.normal(ks, (batch, STATE_DIM), jnp.float32)
    action = jax.random.uniform(ka, (batch, ACTION_DIM), jnp.float32, -1.0, 1.0)

    out = critic_forward(state, action, prep)
    out = jax.block_until_ready(out)

    ref = reference_forward(state, action, params)
    assert out.shape == (batch, 1)
    # Tolerance relaxed vs the pure-f32 reference because MXU operands are bf16.
    assert jnp.allclose(out, ref, atol=5e-2, rtol=5e-2), (out, ref)

    print("KERNEL_OK")
</pallas_src>

<mosaic_0001>
module attributes {stable_mosaic.version = 11 : i64} {
  func.func @critic_kernel(%arg0: i32, %arg1: memref<10x128xf32, #tpu.memory_space<vmem>>, %arg2: memref<192x10xbf16, #tpu.memory_space<vmem>>, %arg3: memref<192x1xf32, #tpu.memory_space<vmem>>, %arg4: memref<128x1xf32, #tpu.memory_space<vmem>>, %arg5: memref<128x1xf32, #tpu.memory_space<vmem>>, %arg6: memref<64x128xbf16, #tpu.memory_space<vmem>>, %arg7: memref<64x1xf32, #tpu.memory_space<vmem>>, %arg8: memref<64x1xf32, #tpu.memory_space<vmem>>, %arg9: memref<64x1xf32, #tpu.memory_space<vmem>>, %arg10: memref<64x1xf32, #tpu.memory_space<vmem>>, %arg11: memref<1x1xf32, #tpu.memory_space<vmem>>, %arg12: memref<1x128xf32, #tpu.memory_space<vmem>>) attributes {dimension_semantics = [#tpu.dimension_semantics<parallel>], iteration_bounds = array<i64: 1>, scalar_prefetch = 0 : i64, scratch_operands = 0 : i64, tpu.core_type = #tpu.core_type<tc>, window_params = [{transform_indices = @transform_0, window_bounds = array<i64: 10, 128>}, {pipeline_mode = #tpu.pipeline_mode<synchronous>, transform_indices = @transform_1, window_bounds = array<i64: 192, 10>}, {pipeline_mode = #tpu.pipeline_mode<synchronous>, transform_indices = @transform_2, window_bounds = array<i64: 192, 1>}, {pipeline_mode = #tpu.pipeline_mode<synchronous>, transform_indices = @transform_3, window_bounds = array<i64: 128, 1>}, {pipeline_mode = #tpu.pipeline_mode<synchronous>, transform_indices = @transform_4, window_bounds = array<i64: 128, 1>}, {pipeline_mode = #tpu.pipeline_mode<synchronous>, transform_indices = @transform_5, window_bounds = array<i64: 64, 128>}, {pipeline_mode = #tpu.pipeline_mode<synchronous>, transform_indices = @transform_6, window_bounds = array<i64: 64, 1>}, {pipeline_mode = #tpu.pipeline_mode<synchronous>, transform_indices = @transform_7, window_bounds = array<i64: 64, 1>}, {pipeline_mode = #tpu.pipeline_mode<synchronous>, transform_indices = @transform_8, window_bounds = array<i64: 64, 1>}, {pipeline_mode = #tpu.pipeline_mode<synchronous>, transform_indices = @transform_9, window_bounds = array<i64: 64, 1>}, {pipeline_mode = #tpu.pipeline_mode<synchronous>, transform_indices = @transform_10, window_bounds = array<i64: 1, 1>}, {transform_indices = @transform_11, window_bounds = array<i64: 1, 128>}]} {
    %c0 = arith.constant 0 : index
    %c0_0 = arith.constant 0 : index
    %0 = vector.load %arg1[%c0, %c0_0] : memref<10x128xf32, #tpu.memory_space<vmem>>, vector<10x128xf32>
    %1 = arith.truncf %0 : vector<10x128xf32> to vector<10x128xbf16>
    %c0_1 = arith.constant 0 : index
    %c0_2 = arith.constant 0 : index
    %2 = vector.load %arg2[%c0_1, %c0_2] : memref<192x10xbf16, #tpu.memory_space<vmem>>, vector<192x10xbf16>
    %cst = arith.constant dense<0.000000e+00> : vector<192x128xf32>
    %3 = tpu.matmul %2, %1, %cst {dimension_numbers = #tpu.dot_dimension_numbers<[1], [0], [0], [1], [0, 0, 1, 1], [], []>} : vector<192x10xbf16>, vector<10x128xbf16>, vector<192x128xf32> -> vector<192x128xf32>
    %c0_3 = arith.constant 0 : index
    %c0_4 = arith.constant 0 : index
    %4 = vector.load %arg3[%c0_3, %c0_4] : memref<192x1xf32, #tpu.memory_space<vmem>>, vector<192x1xf32>
    %5 = vector.broadcast %4 : vector<192x1xf32> to vector<192x128xf32>
    %6 = arith.addf %3, %5 : vector<192x128xf32>
    %7 = vector.extract_strided_slice %6 {offsets = [0, 0], sizes = [128, 128], strides = [1, 1]} : vector<192x128xf32> to vector<128x128xf32>
    %8 = vector.extract_strided_slice %6 {offsets = [128, 0], sizes = [64, 128], strides = [1, 1]} : vector<192x128xf32> to vector<64x128xf32>
    %c0_5 = arith.constant 0 : index
    %c0_6 = arith.constant 0 : index
    %9 = vector.load %arg4[%c0_5, %c0_6] : memref<128x1xf32, #tpu.memory_space<vmem>>, vector<128x1xf32>
    %c0_7 = arith.constant 0 : index
    %c0_8 = arith.constant 0 : index
    %10 = vector.load %arg5[%c0_7, %c0_8] : memref<128x1xf32, #tpu.memory_space<vmem>>, vector<128x1xf32>
    %cst_9 = arith.constant dense<0.000000e+00> : vector<128xf32>
    %11 = vector.multi_reduction <add>, %7, %cst_9 [0] : vector<128x128xf32> to vector<128xf32>
    %12 = vector.shape_cast %11 : vector<128xf32> to vector<1x128xf32>
    %cst_10 = arith.constant 1.280000e+02 : f32
    %13 = vector.broadcast %cst_10 : f32 to vector<1x128xf32>
    %14 = arith.divf %12, %13 : vector<1x128xf32>
    %15 = arith.mulf %7, %7 : vector<128x128xf32>
    %cst_11 = arith.constant dense<0.000000e+00> : vector<128xf32>
    %16 = vector.multi_reduction <add>, %15, %cst_11 [0] : vector<128x128xf32> to vector<128xf32>
    %17 = vector.shape_cast %16 : vector<128xf32> to vector<1x128xf32>
    %cst_12 = arith.constant 1.280000e+02 : f32
    %18 = vector.broadcast %cst_12 : f32 to vector<1x128xf32>
    %19 = arith.divf %17, %18 : vector<1x128xf32>
    %20 = arith.mulf %14, %14 : vector<1x128xf32>
    %21 = arith.subf %19, %20 : vector<1x128xf32>
    %cst_13 = arith.constant 0.000000e+00 : f32
    %22 = vector.broadcast %cst_13 : f32 to vector<1x128xf32>
    %23 = arith.maximumf %21, %22 : vector<1x128xf32>
    %cst_14 = arith.constant 9.99999974E-6 : f32
    %24 = vector.broadcast %cst_14 : f32 to vector<1x128xf32>
    %25 = arith.addf %23, %24 : vector<1x128xf32>
    %26 = math.rsqrt %25 : vector<1x128xf32>
    %27 = vector.broadcast %14 : vector<1x128xf32> to vector<128x128xf32>
    %28 = arith.subf %7, %27 : vector<128x128xf32>
    %29 = vector.broadcast %26 : vector<1x128xf32> to vector<128x128xf32>
    %30 = arith.mulf %28, %29 : vector<128x128xf32>
    %31 = vector.broadcast %9 : vector<128x1xf32> to vector<128x128xf32>
    %32 = arith.mulf %30, %31 : vector<128x128xf32>
    %33 = vector.broadcast %10 : vector<128x1xf32> to vector<128x128xf32>
    %34 = arith.addf %32, %33 : vector<128x128xf32>
    %cst_15 = arith.constant 0.000000e+00 : f32
    %35 = vector.broadcast %cst_15 : f32 to vector<128x128xf32>
    %36 = arith.maximumf %34, %35 : vector<128x128xf32>
    %c0_16 = arith.constant 0 : index
    %c0_17 = arith.constant 0 : index
    %37 = vector.load %arg6[%c0_16, %c0_17] : memref<64x128xbf16, #tpu.memory_space<vmem>>, vector<64x128xbf16>
    %38 = arith.truncf %36 : vector<128x128xf32> to vector<128x128xbf16>
    %cst_18 = arith.constant dense<0.000000e+00> : vector<64x128xf32>
    %39 = tpu.matmul %37, %38, %cst_18 {dimension_numbers = #tpu.dot_dimension_numbers<[1], [0], [0], [1], [0, 0, 1, 1], [], []>} : vector<64x128xbf16>, vector<128x128xbf16>, vector<64x128xf32> -> vector<64x128xf32>
    %c0_19 = arith.constant 0 : index
    %c0_20 = arith.constant 0 : index
    %40 = vector.load %arg7[%c0_19, %c0_20] : memref<64x1xf32, #tpu.memory_space<vmem>>, vector<64x1xf32>
    %41 = vector.broadcast %40 : vector<64x1xf32> to vector<64x128xf32>
    %42 = arith.addf %39, %41 : vector<64x128xf32>
    %c0_21 = arith.constant 0 : index
    %c0_22 = arith.constant 0 : index
    %43 = vector.load %arg8[%c0_21, %c0_22] : memref<64x1xf32, #tpu.memory_space<vmem>>, vector<64x1xf32>
    %c0_23 = arith.constant 0 : index
    %c0_24 = arith.constant 0 : index
    %44 = vector.load %arg9[%c0_23, %c0_24] : memref<64x1xf32, #tpu.memory_space<vmem>>, vector<64x1xf32>
    %cst_25 = arith.constant dense<0.000000e+00> : vector<128xf32>
    %45 = vector.multi_reduction <add>, %42, %cst_25 [0] : vector<64x128xf32> to vector<128xf32>
    %46 = vector.shape_cast %45 : vector<128xf32> to vector<1x128xf32>
    %cst_26 = arith.constant 6.400000e+01 : f32
    %47 = vector.broadcast %cst_26 : f32 to vector<1x128xf32>
    %48 = arith.divf %46, %47 : vector<1x128xf32>
    %49 = arith.mulf %42, %42 : vector<64x128xf32>
    %cst_27 = arith.constant dense<0.000000e+00> : vector<128xf32>
    %50 = vector.multi_reduction <add>, %49, %cst_27 [0] : vector<64x128xf32> to vector<128xf32>
    %51 = vector.shape_cast %50 : vector<128xf32> to vector<1x128xf32>
    %cst_28 = arith.constant 6.400000e+01 : f32
    %52 = vector.broadcast %cst_28 : f32 to vector<1x128xf32>
    %53 = arith.divf %51, %52 : vector<1x128xf32>
    %54 = arith.mulf %48, %48 : vector<1x128xf32>
    %55 = arith.subf %53, %54 : vector<1x128xf32>
    %cst_29 = arith.constant 0.000000e+00 : f32
    %56 = vector.broadcast %cst_29 : f32 to vector<1x128xf32>
    %57 = arith.maximumf %55, %56 : vector<1x128xf32>
    %cst_30 = arith.constant 9.99999974E-6 : f32
    %58 = vector.broadcast %cst_30 : f32 to vector<1x128xf32>
    %59 = arith.addf %57, %58 : vector<1x128xf32>
    %60 = math.rsqrt %59 : vector<1x128xf32>
    %61 = vector.broadcast %48 : vector<1x128xf32> to vector<64x128xf32>
    %62 = arith.subf %42, %61 : vector<64x128xf32>
    %63 = vector.broadcast %60 : vector<1x128xf32> to vector<64x128xf32>
    %64 = arith.mulf %62, %63 : vector<64x128xf32>
    %65 = vector.broadcast %43 : vector<64x1xf32> to vector<64x128xf32>
    %66 = arith.mulf %64, %65 : vector<64x128xf32>
    %67 = vector.broadcast %44 : vector<64x1xf32> to vector<64x128xf32>
    %68 = arith.addf %66, %67 : vector<64x128xf32>
    %cst_31 = arith.constant 0.000000e+00 : f32
    %69 = vector.broadcast %cst_31 : f32 to vector<64x128xf32>
    %70 = arith.maximumf %8, %69 : vector<64x128xf32>
    %71 = arith.addf %68, %70 : vector<64x128xf32>
    %cst_32 = arith.constant 0.000000e+00 : f32
    %72 = vector.broadcast %cst_32 : f32 to vector<64x128xf32>
    %73 = arith.maximumf %71, %72 : vector<64x128xf32>
    %c0_33 = arith.constant 0 : index
    %c0_34 = arith.constant 0 : index
    %74 = vector.load %arg10[%c0_33, %c0_34] : memref<64x1xf32, #tpu.memory_space<vmem>>, vector<64x1xf32>
    %75 = vector.broadcast %74 : vector<64x1xf32> to vector<64x128xf32>
    %76 = arith.mulf %73, %75 : vector<64x128xf32>
    %cst_35 = arith.constant dense<0.000000e+00> : vector<128xf32>
    %77 = vector.multi_reduction <add>, %76, %cst_35 [0] : vector<64x128xf32> to vector<128xf32>
    %78 = vector.shape_cast %77 : vector<128xf32> to vector<1x128xf32>
    %c0_36 = arith.constant 0 : index
    %c0_37 = arith.constant 0 : index
    %79 = vector.load %arg11[%c0_36, %c0_37] : memref<1x1xf32, #tpu.memory_space<vmem>>, vector<1x1xf32>
    %80 = vector.broadcast %79 : vector<1x1xf32> to vector<1x128xf32>
    %81 = arith.addf %78, %80 : vector<1x128xf32>
    %c0_38 = arith.constant 0 : index
    %c0_39 = arith.constant 0 : index
    %82 = vector.load %arg12[%c0_38, %c0_39] : memref<1x128xf32, #tpu.memory_space<vmem>>, vector<1x128xf32>
    tpu.vector_store %arg12[%c0_38, %c0_39], %81 {strides = array<i32>} : memref<1x128xf32, #tpu.memory_space<vmem>>, vector<1x128xf32>,
    return
  }
  func.func @transform_0(%arg0: i32) -> (i32, i32) {
    %c0_i32 = arith.constant 0 : i32
    %c0_i32_0 = arith.constant 0 : i32
    return %c0_i32, %arg0 : i32, i32
  }
  func.func @transform_1(%arg0: i32) -> (i32, i32) {
    %c0_i32 = arith.constant 0 : i32
    %c0_i32_0 = arith.constant 0 : i32
    %c0_i32_1 = arith.constant 0 : i32
    return %c0_i32, %c0_i32_0 : i32, i32
  }
  func.func @transform_2(%arg0: i32) -> (i32, i32) {
    %c0_i32 = arith.constant 0 : i32
    %c0_i32_0 = arith.constant 0 : i32
    %c0_i32_1 = arith.constant 0 : i32
    return %c0_i32, %c0_i32_0 : i32, i32
  }
  func.func @transform_3(%arg0: i32) -> (i32, i32) {
    %c0_i32 = arith.constant 0 : i32
    %c0_i32_0 = arith.constant 0 : i32
    %c0_i32_1 = arith.constant 0 : i32
    return %c0_i32, %c0_i32_0 : i32, i32
  }
  func.func @transform_4(%arg0: i32) -> (i32, i32) {
    %c0_i32 = arith.constant 0 : i32
    %c0_i32_0 = arith.constant 0 : i32
    %c0_i32_1 = arith.constant 0 : i32
    return %c0_i32, %c0_i32_0 : i32, i32
  }
  func.func @transform_5(%arg0: i32) -> (i32, i32) {
    %c0_i32 = arith.constant 0 : i32
    %c0_i32_0 = arith.constant 0 : i32
    %c0_i32_1 = arith.constant 0 : i32
    return %c0_i32, %c0_i32_0 : i32, i32
  }
  func.func @transform_6(%arg0: i32) -> (i32, i32) {
    %c0_i32 = arith.constant 0 : i32
    %c0_i32_0 = arith.constant 0 : i32
    %c0_i32_1 = arith.constant 0 : i32
    return %c0_i32, %c0_i32_0 : i32, i32
  }
  func.func @transform_7(%arg0: i32) -> (i32, i32) {
    %c0_i32 = arith.constant 0 : i32
    %c0_i32_0 = arith.constant 0 : i32
    %c0_i32_1 = arith.constant 0 : i32
    return %c0_i32, %c0_i32_0 : i32, i32
  }
  func.func @transform_8(%arg0: i32) -> (i32, i32) {
    %c0_i32 = arith.constant 0 : i32
    %c0_i32_0 = arith.constant 0 : i32
    %c0_i32_1 = arith.constant 0 : i32
    return %c0_i32, %c0_i32_0 : i32, i32
  }
  func.func @transform_9(%arg0: i32) -> (i32, i32) {
    %c0_i32 = arith.constant 0 : i32
    %c0_i32_0 = arith.constant 0 : i32
    %c0_i32_1 = arith.constant 0 : i32
    return %c0_i32, %c0_i32_0 : i32, i32
  }
  func.func @transform_10(%arg0: i32) -> (i32, i32) {
    %c0_i32 = arith.constant 0 : i32
    %c0_i32_0 = arith.constant 0 : i32
    %c0_i32_1 = arith.constant 0 : i32
    return %c0_i32, %c0_i32_0 : i32, i32
  }
  func.func @transform_11(%arg0: i32) -> (i32, i32) {
    %c0_i32 = arith.constant 0 : i32
    %c0_i32_0 = arith.constant 0 : i32
    return %c0_i32, %arg0 : i32, i32
  }
}

</mosaic_0001>

<llo_original>
// kernel: critic_forward.1
$region0: #{critic_forward.1}
  #allocation0 [shape = 'u32[]', space=smem, size = 0x4, offset = 0x4, fixed_abs, tag = 'smem constant byte address 0x4 - core index']
  #allocation1 [shape = 'u32[144,128]{1,0:T(1,128)}', space=vmem, size = 0x12000, scoped, tag = 'internal scratch']
  #allocation2 [shape = 'f32[1,1]{1,0:T(1,128)S(1)}', space=vmem, size = 0x200, scoped, tag = 'scoped memory for critic_forward.1']
  %s0 = inlined_call_operand.vmem [shape: f32[10,128], index: 0, kind: input, shape index: {}]
  %s1 = inlined_call_operand.vmem [shape: bf16[192,10], index: 1, kind: input, shape index: {}]
  %s2 = inlined_call_operand.vmem [shape: f32[192,1], index: 2, kind: input, shape index: {}]
  %s3 = inlined_call_operand.vmem [shape: f32[128,1], index: 3, kind: input, shape index: {}]
  %s4 = inlined_call_operand.vmem [shape: f32[128,1], index: 4, kind: input, shape index: {}]
  %s5 = inlined_call_operand.vmem [shape: bf16[64,128], index: 5, kind: input, shape index: {}]
  %s6 = inlined_call_operand.vmem [shape: f32[64,1], index: 6, kind: input, shape index: {}]
  %s7 = inlined_call_operand.vmem [shape: f32[64,1], index: 7, kind: input, shape index: {}]
  %s8 = inlined_call_operand.vmem [shape: f32[64,1], index: 8, kind: input, shape index: {}]
  %s9 = inlined_call_operand.vmem [shape: f32[64,1], index: 9, kind: input, shape index: {}]
  %s10 = inlined_call_operand.<no memory space> [shape: f32[1,1], index: 10, kind: input, shape index: {}]
  %s11 = inlined_call_operand.vmem [shape: f32[1,128], index: 11, kind: output, shape index: {}]
  %s12 = sld [smem:[#allocation0]]
  $region54: #{critic_forward.1} parent=0
    _
  %s14 = ssub.s32 1, %s12
  %s15 = scalar_select 0, %s14, %s12
  %v16 = vstv %s10
  %17 = vst [vmem:[#allocation2] sm:$0x1] %v16
  // Predicated region
  $region2: #{critic_forward.1} parent=0 // pred_check
    _
  $region3: #{critic_forward.1} parent=0 // pred_check_branch
    %19 = sbr.rel (0) target = $region5
  $region4: #{critic_forward.1} parent=0 // pred_region
    _
  $region5: #{critic_forward.1} parent=0 // pred_fallthru
    _
  // Predicated region
  $region6: #{critic_forward.1} parent=0 // pred_check
    _
  $region7: #{critic_forward.1} parent=0 // pred_check_branch
    %21 = sbr.rel (0) target = $region9
  $region8: #{critic_forward.1} parent=0 // pred_region
    _
  $region9: #{critic_forward.1} parent=0 // pred_fallthru
    _
  // Predicated region
  $region10: #{critic_forward.1} parent=0 // pred_check
    _
  $region11: #{critic_forward.1} parent=0 // pred_check_branch
    %23 = sbr.rel (0) target = $region13
  $region12: #{critic_forward.1} parent=0 // pred_region
    _
  $region13: #{critic_forward.1} parent=0 // pred_fallthru
    _
  // Predicated region
  $region14: #{critic_forward.1} parent=0 // pred_check
    _
  $region15: #{critic_forward.1} parent=0 // pred_check_branch
    %25 = sbr.rel (0) target = $region17
  $region16: #{critic_forward.1} parent=0 // pred_region
    _
  $region17: #{critic_forward.1} parent=0 // pred_fallthru
    _
  // Predicated region
  $region18: #{critic_forward.1} parent=0 // pred_check
    _
  $region19: #{critic_forward.1} parent=0 // pred_check_branch
    %27 = sbr.rel (0) target = $region21
  $region20: #{critic_forward.1} parent=0 // pred_region
    _
  $region21: #{critic_forward.1} parent=0 // pred_fallthru
    _
  // Predicated region
  $region22: #{critic_forward.1} parent=0 // pred_check
    _
  $region23: #{critic_forward.1} parent=0 // pred_check_branch
    %29 = sbr.rel (0) target = $region25
  $region24: #{critic_forward.1} parent=0 // pred_region
    _
  $region25: #{critic_forward.1} parent=0 // pred_fallthru
    _
  // Predicated region
  $region26: #{critic_forward.1} parent=0 // pred_check
    _
  $region27: #{critic_forward.1} parent=0 // pred_check_branch
    %31 = sbr.rel (0) target = $region29
  $region28: #{critic_forward.1} parent=0 // pred_region
    _
  $region29: #{critic_forward.1} parent=0 // pred_fallthru
    _
  // Predicated region
  $region30: #{critic_forward.1} parent=0 // pred_check
    _
  $region31: #{critic_forward.1} parent=0 // pred_check_branch
    %33 = sbr.rel (0) target = $region33
  $region32: #{critic_forward.1} parent=0 // pred_region
    _
  $region33: #{critic_forward.1} parent=0 // pred_fallthru
    _
  // Predicated region
  $region34: #{critic_forward.1} parent=0 // pred_check
    _
  $region35: #{critic_forward.1} parent=0 // pred_check_branch
    %35 = sbr.rel (0) target = $region37
  $region36: #{critic_forward.1} parent=0 // pred_region
    _
  $region37: #{critic_forward.1} parent=0 // pred_fallthru
    _
  // Predicated region
  $region38: #{critic_forward.1} parent=0 // pred_check
    _
  $region39: #{critic_forward.1} parent=0 // pred_check_branch
    %37 = sbr.rel (0) target = $region41
  $region40: #{critic_forward.1} parent=0 // pred_region
    _
  $region41: #{critic_forward.1} parent=0 // pred_fallthru
    _
  // Predicated region
  $region42: #{critic_forward.1} parent=0 // pred_check
    _
  $region43: #{critic_forward.1} parent=0 // pred_check_branch
    %39 = sbr.rel (0) target = $region45
  $region44: #{critic_forward.1} parent=0 // pred_region
    _
  $region45: #{critic_forward.1} parent=0 // pred_fallthru
    _
  %v41 = vld [vmem:[%s0] sm:$0xff]
  %v42 = vld [vmem:[%s0 + $0x8] sm:$0x3]
  %v43 = vpack.c.bf16 %v42, %v41
  %v44 = vld [vmem:[%s1] sm:$0xf]
  %v45 = vld [vmem:[%s1 + $0x4] sm:$0xf]
  %v46 = vld [vmem:[%s1 + $0x8] sm:$0xf]
  %v47 = vld [vmem:[%s1 + $0xc] sm:$0xf]
  %v48 = vld [vmem:[%s1 + $0x10] sm:$0xf]
  %v49 = vld [vmem:[%s1 + $0x14] sm:$0xf]
  %v50 = vld [vmem:[%s1 + $0x18] sm:$0xf]
  %v51 = vld [vmem:[%s1 + $0x1c] sm:$0xf]
  %v52 = vld [vmem:[%s1 + $0x20] sm:$0xf]
  %v53 = vld [vmem:[%s1 + $0x24] sm:$0xf]
  %v54 = vld [vmem:[%s1 + $0x28] sm:$0xf]
  %v55 = vld [vmem:[%s1 + $0x2c] sm:$0xf]
  %v56 = vld [vmem:[%s1 + $0x30] sm:$0xf]
  %v57 = vld [vmem:[%s1 + $0x34] sm:$0xf]
  %v58 = vld [vmem:[%s1 + $0x38] sm:$0xf]
  %v59 = vld [vmem:[%s1 + $0x3c] sm:$0xf]
  %v60 = vld [vmem:[%s1 + $0x40] sm:$0xf]
  %v61 = vld [vmem:[%s1 + $0x44] sm:$0xf]
  %v62 = vld [vmem:[%s1 + $0x48] sm:$0xf]
  %v63 = vld [vmem:[%s1 + $0x4c] sm:$0xf]
  %v64 = vld [vmem:[%s1 + $0x50] sm:$0xf]
  %v65 = vld [vmem:[%s1 + $0x54] sm:$0xf]
  %v66 = vld [vmem:[%s1 + $0x58] sm:$0xf]
  %v67 = vld [vmem:[%s1 + $0x5c] sm:$0xf]
  %v68 = vld [vmem:[%s2] sm:$0xff]
  %v69 = vld [vmem:[%s2 + $0x8] sm:$0xff]
  %v70 = vld [vmem:[%s2 + $0x10] sm:$0xff]
  %v71 = vld [vmem:[%s2 + $0x18] sm:$0xff]
  %v72 = vld [vmem:[%s2 + $0x20] sm:$0xff]
  %v73 = vld [vmem:[%s2 + $0x28] sm:$0xff]
  %v74 = vld [vmem:[%s2 + $0x30] sm:$0xff]
  %v75 = vld [vmem:[%s2 + $0x38] sm:$0xff]
  %v76 = vld [vmem:[%s2 + $0x40] sm:$0xff]
  %v77 = vld [vmem:[%s2 + $0x48] sm:$0xff]
  %v78 = vld [vmem:[%s2 + $0x50] sm:$0xff]
  %v79 = vld [vmem:[%s2 + $0x58] sm:$0xff]
  %v80 = vld [vmem:[%s2 + $0x60] sm:$0xff]
  %v81 = vld [vmem:[%s2 + $0x68] sm:$0xff]
  %v82 = vld [vmem:[%s2 + $0x70] sm:$0xff]
  %v83 = vld [vmem:[%s2 + $0x78] sm:$0xff]
  %v84 = vld [vmem:[%s2 + $0x80] sm:$0xff]
  %v85 = vld [vmem:[%s2 + $0x88] sm:$0xff]
  %v86 = vld [vmem:[%s2 + $0x90] sm:$0xff]
  %v87 = vld [vmem:[%s2 + $0x98] sm:$0xff]
  %v88 = vld [vmem:[%s2 + $0xa0] sm:$0xff]
  %v89 = vld [vmem:[%s2 + $0xa8] sm:$0xff]
  %v90 = vld [vmem:[%s2 + $0xb0] sm:$0xff]
  %v91 = vld [vmem:[%s2 + $0xb8] sm:$0xff]
  %93 = vset.pattern.permute.xlu0 0
  %94 = vperm.xlu0 %93, %v68
  %v95 = vpop.permute.xlu0 %94
  %98 = vset.pattern.permute.xlu0 0
  %99 = vperm.xlu0 %98, %v69
  %v100 = vpop.permute.xlu0 %99
  %103 = vset.pattern.permute.xlu0 0
  %104 = vperm.xlu0 %103, %v70
  %v105 = vpop.permute.xlu0 %104
  %108 = vset.pattern.permute.xlu0 0
  %109 = vperm.xlu0 %108, %v71
  %v110 = vpop.permute.xlu0 %109
  %113 = vset.pattern.permute.xlu0 0
  %114 = vperm.xlu0 %113, %v72
  %v115 = vpop.permute.xlu0 %114
  %118 = vset.pattern.permute.xlu0 0
  %119 = vperm.xlu0 %118, %v73
  %v120 = vpop.permute.xlu0 %119
  %123 = vset.pattern.permute.xlu0 0
  %124 = vperm.xlu0 %123, %v74
  %v125 = vpop.permute.xlu0 %124
  %128 = vset.pattern.permute.xlu0 0
  %129 = vperm.xlu0 %128, %v75
  %v130 = vpop.permute.xlu0 %129
  %133 = vset.pattern.permute.xlu0 0
  %134 = vperm.xlu0 %133, %v76
  %v135 = vpop.permute.xlu0 %134
  %138 = vset.pattern.permute.xlu0 0
  %139 = vperm.xlu0 %138, %v77
  %v140 = vpop.permute.xlu0 %139
  %143 = vset.pattern.permute.xlu0 0
  %144 = vperm.xlu0 %143, %v78
  %v145 = vpop.permute.xlu0 %144
  %148 = vset.pattern.permute.xlu0 0
  %149 = vperm.xlu0 %148, %v79
  %v150 = vpop.permute.xlu0 %149
  %153 = vset.pattern.permute.xlu0 0
  %154 = vperm.xlu0 %153, %v80
  %v155 = vpop.permute.xlu0 %154
  %158 = vset.pattern.permute.xlu0 0
  %159 = vperm.xlu0 %158, %v81
  %v160 = vpop.permute.xlu0 %159
  %163 = vset.pattern.permute.xlu0 0
  %164 = vperm.xlu0 %163, %v82
  %v165 = vpop.permute.xlu0 %164
  %168 = vset.pattern.permute.xlu0 0
  %169 = vperm.xlu0 %168, %v83
  %v170 = vpop.permute.xlu0 %169
  %173 = vset.pattern.permute.xlu0 0
  %174 = vperm.xlu0 %173, %v84
  %v175 = vpop.permute.xlu0 %174
  %178 = vset.pattern.permute.xlu0 0
  %179 = vperm.xlu0 %178, %v85
  %v180 = vpop.permute.xlu0 %179
  %183 = vset.pattern.permute.xlu0 0
  %184 = vperm.xlu0 %183, %v86
  %v185 = vpop.permute.xlu0 %184
  %188 = vset.pattern.permute.xlu0 0
  %189 = vperm.xlu0 %188, %v87
  %v190 = vpop.permute.xlu0 %189
  %193 = vset.pattern.permute.xlu0 0
  %194 = vperm.xlu0 %193, %v88
  %v195 = vpop.permute.xlu0 %194
  %198 = vset.pattern.permute.xlu0 0
  %199 = vperm.xlu0 %198, %v89
  %v200 = vpop.permute.xlu0 %199
  %203 = vset.pattern.permute.xlu0 0
  %204 = vperm.xlu0 %203, %v90
  %v205 = vpop.permute.xlu0 %204
  %208 = vset.pattern.permute.xlu0 0
  %209 = vperm.xlu0 %208, %v91
  %v210 = vpop.permute.xlu0 %209
  %v236 = vunpack.c.l.b16 %v44
  %v237 = vunpack.c.l.b16 %v45
  %v238 = vunpack.c.l.b16 %v46
  %v239 = vunpack.c.l.b16 %v47
  %v240 = vunpack.c.l.b16 %v48
  %v241 = vunpack.c.l.b16 %v49
  %v242 = vunpack.c.l.b16 %v50
  %v243 = vunpack.c.l.b16 %v51
  %v244 = vunpack.c.l.b16 %v52
  %v245 = vunpack.c.l.b16 %v53
  %v246 = vunpack.c.l.b16 %v54
  %v247 = vunpack.c.l.b16 %v55
  %v248 = vunpack.c.l.b16 %v56
  %v249 = vunpack.c.l.b16 %v57
  %v250 = vunpack.c.l.b16 %v58
  %v251 = vunpack.c.l.b16 %v59
  %v252 = vunpack.c.l.b16 %v60
  %v253 = vunpack.c.l.b16 %v61
  %v254 = vunpack.c.l.b16 %v62
  %v255 = vunpack.c.l.b16 %v63
  %v256 = vunpack.c.l.b16 %v64
  %v257 = vunpack.c.l.b16 %v65
  %v258 = vunpack.c.l.b16 %v66
  %v259 = vunpack.c.l.b16 %v67
  %v260 = vpack.c.b16 %v237, %v236
  %v261 = vpack.c.b16 %v239, %v238
  %v262 = vpack.c.b16 %v241, %v240
  %v263 = vpack.c.b16 %v243, %v242
  %v264 = vpack.c.b16 %v245, %v244
  %v265 = vpack.c.b16 %v247, %v246
  %v266 = vpack.c.b16 %v249, %v248
  %v267 = vpack.c.b16 %v251, %v250
  %v268 = vpack.c.b16 %v253, %v252
  %v269 = vpack.c.b16 %v255, %v254
  %v270 = vpack.c.b16 %v257, %v256
  %v271 = vpack.c.b16 %v259, %v258
  %vm272 = vcmask 80896
  %v274 = vsel %vm272, %v260, 0
  %v277 = vsel %vm272, %v261, 0
  %v280 = vsel %vm272, %v262, 0
  %v283 = vsel %vm272, %v263, 0
  %v286 = vsel %vm272, %v264, 0
  %v289 = vsel %vm272, %v265, 0
  %v292 = vsel %vm272, %v266, 0
  %v295 = vsel %vm272, %v267, 0
  %v298 = vsel %vm272, %v268, 0
  %v301 = vsel %vm272, %v269, 0
  %v304 = vsel %vm272, %v270, 0
  %v307 = vsel %vm272, %v271, 0
  %vm309 = vcmask 1044480
  %v311 = vsel %vm309, %v43, 0
  %313 = vmatprep.subr.bf16.mxu0 0
  %314 = vmatpush1.bf16.msra.mxu0 0
  %315 = vmatprep.subr.bf16.mxu0 0
  %316 = vmatpush1.bf16.msra.mxu0 0
  %317 = vmatprep.subr.bf16.mxu0 0
  %318 = vmatpush1.bf16.msra.mxu0 0
  %319 = vmatprep.subr.bf16.mxu0 0
  %320 = vmatpush1.bf16.msra.mxu0 0
  %321 = vmatprep.subr.bf16.mxu0 0
  %322 = vmatpush1.bf16.msra.mxu0 0
  %323 = vmatprep.subr.bf16.mxu0 0
  %324 = vmatpush1.bf16.msra.mxu0 0
  %325 = vmatprep.subr.bf16.mxu0 0
  %326 = vmatpush1.bf16.msra.mxu0 0
  %327 = vmatprep.subr.bf16.mxu0 0
  %328 = vmatpush1.bf16.msra.mxu0 %v311
  %329 = vmatprep.subr.bf16.mxu0 0
  %330 = vmatpush2.bf16.msra.mxu0 0
  %331 = vmatprep.subr.bf16.mxu0 0
  %332 = vmatpush2.bf16.msra.mxu0 0
  %333 = vmatprep.subr.bf16.mxu0 0
  %334 = vmatpush2.bf16.msra.mxu0 0
  %335 = vmatprep.subr.bf16.mxu0 0
  %336 = vmatpush2.bf16.msra.mxu0 0
  %337 = vmatprep.subr.bf16.mxu0 0
  %338 = vmatpush2.bf16.msra.mxu0 0
  %339 = vmatprep.subr.bf16.mxu0 0
  %340 = vmatpush2.bf16.msra.mxu0 0
  %341 = vmatprep.subr.bf16.mxu0 0
  %342 = vmatpush2.bf16.msra.mxu0 0
  %343 = vmatprep.subr.bf16.mxu0 0
  %344 = vmatpush2.bf16.msra.mxu0 0
  %345 = vmatprep.mubr.bf16.mxu0 0
  %346 = vmatmul.mubr.bf16.gmra.mxu0 %v274
  %v347 = vpop.f32.mrf.mxu0
  %v348 = vadd.f32 %v95, %v347
  %v349 = vpop.f32.mrf.mxu0
  %v350 = vpop.f32.mrf.mxu0
  %v351 = vadd.f32 %v100, %v350
  %v352 = vpop.f32.mrf.mxu0
  %353 = vmatprep.mubr.bf16.mxu0 0
  %354 = vmatmul.mubr.bf16.gmra.mxu0 %v277
  %v355 = vpop.f32.mrf.mxu0
  %v356 = vadd.f32 %v105, %v355
  %v357 = vpop.f32.mrf.mxu0
  %v358 = vpop.f32.mrf.mxu0
  %v359 = vadd.f32 %v110, %v358
  %v360 = vpop.f32.mrf.mxu0
  %361 = vmatprep.mubr.bf16.mxu0 0
  %362 = vmatmul.mubr.bf16.gmra.mxu0 %v280
  %v363 = vpop.f32.mrf.mxu0
  %v364 = vadd.f32 %v115, %v363
  %v365 = vpop.f32.mrf.mxu0
  %v366 = vpop.f32.mrf.mxu0
  %v367 = vadd.f32 %v120, %v366
  %v368 = vpop.f32.mrf.mxu0
  %369 = vmatprep.mubr.bf16.mxu0 0
  %370 = vmatmul.mubr.bf16.gmra.mxu0 %v283
  %v371 = vpop.f32.mrf.mxu0
  %v372 = vadd.f32 %v125, %v371
  %v373 = vpop.f32.mrf.mxu0
  %v374 = vpop.f32.mrf.mxu0
  %v375 = vadd.f32 %v130, %v374
  %v376 = vpop.f32.mrf.mxu0
  %377 = vmatprep.mubr.bf16.mxu0 0
  %378 = vmatmul.mubr.bf16.gmra.mxu0 %v286
  %v379 = vpop.f32.mrf.mxu0
  %v380 = vadd.f32 %v135, %v379
  %v381 = vpop.f32.mrf.mxu0
  %v382 = vpop.f32.mrf.mxu0
  %v383 = vadd.f32 %v140, %v382
  %v384 = vpop.f32.mrf.mxu0
  %385 = vmatprep.mubr.bf16.mxu0 0
  %386 = vmatmul.mubr.bf16.gmra.mxu0 %v289
  %v387 = vpop.f32.mrf.mxu0
  %v388 = vadd.f32 %v145, %v387
  %v389 = vpop.f32.mrf.mxu0
  %v390 = vpop.f32.mrf.mxu0
  %v391 = vadd.f32 %v150, %v390
  %v392 = vpop.f32.mrf.mxu0
  %393 = vmatprep.mubr.bf16.mxu0 0
  %394 = vmatmul.mubr.bf16.gmra.mxu0 %v292
  %v395 = vpop.f32.mrf.mxu0
  %v396 = vadd.f32 %v155, %v395
  %v397 = vpop.f32.mrf.mxu0
  %v398 = vpop.f32.mrf.mxu0
  %v399 = vadd.f32 %v160, %v398
  %v400 = vpop.f32.mrf.mxu0
  %401 = vmatprep.mubr.bf16.mxu0 0
  %402 = vmatmul.mubr.bf16.gmra.mxu0 %v295
  %v403 = vpop.f32.mrf.mxu0
  %v404 = vadd.f32 %v165, %v403
  %v405 = vpop.f32.mrf.mxu0
  %v406 = vpop.f32.mrf.mxu0
  %v407 = vadd.f32 %v170, %v406
  %v408 = vpop.f32.mrf.mxu0
  %409 = vmatprep.mubr.bf16.mxu0 0
  %410 = vmatmul.mubr.bf16.gmra.mxu0 %v298
  %v411 = vpop.f32.mrf.mxu0
  %v412 = vadd.f32 %v175, %v411
  %v413 = vpop.f32.mrf.mxu0
  %v414 = vpop.f32.mrf.mxu0
  %v415 = vadd.f32 %v180, %v414
  %v416 = vpop.f32.mrf.mxu0
  %417 = vmatprep.mubr.bf16.mxu0 0
  %418 = vmatmul.mubr.bf16.gmra.mxu0 %v301
  %v419 = vpop.f32.mrf.mxu0
  %v420 = vadd.f32 %v185, %v419
  %v421 = vpop.f32.mrf.mxu0
  %v422 = vpop.f32.mrf.mxu0
  %v423 = vadd.f32 %v190, %v422
  %v424 = vpop.f32.mrf.mxu0
  %425 = vmatprep.mubr.bf16.mxu0 0
  %426 = vmatmul.mubr.bf16.gmra.mxu0 %v304
  %v427 = vpop.f32.mrf.mxu0
  %v428 = vadd.f32 %v195, %v427
  %v429 = vpop.f32.mrf.mxu0
  %v430 = vpop.f32.mrf.mxu0
  %v431 = vadd.f32 %v200, %v430
  %v432 = vpop.f32.mrf.mxu0
  %433 = vmatprep.mubr.bf16.mxu0 0
  %434 = vmatmul.mubr.bf16.gmra.mxu0 %v307
  %v435 = vpop.f32.mrf.mxu0
  %v436 = vadd.f32 %v205, %v435
  %v437 = vpop.f32.mrf.mxu0
  %v438 = vpop.f32.mrf.mxu0
  %v439 = vadd.f32 %v210, %v438
  %v440 = vpop.f32.mrf.mxu0
  %441 = vdwg.mxu0
  %v442 = vld [vmem:[%s3] sm:$0xff]
  %v443 = vld [vmem:[%s3 + $0x8] sm:$0xff]
  %v444 = vld [vmem:[%s3 + $0x10] sm:$0xff]
  %v445 = vld [vmem:[%s3 + $0x18] sm:$0xff]
  %v446 = vld [vmem:[%s3 + $0x20] sm:$0xff]
  %v447 = vld [vmem:[%s3 + $0x28] sm:$0xff]
  %v448 = vld [vmem:[%s3 + $0x30] sm:$0xff]
  %v449 = vld [vmem:[%s3 + $0x38] sm:$0xff]
  %v450 = vld [vmem:[%s3 + $0x40] sm:$0xff]
  %v451 = vld [vmem:[%s3 + $0x48] sm:$0xff]
  %v452 = vld [vmem:[%s3 + $0x50] sm:$0xff]
  %v453 = vld [vmem:[%s3 + $0x58] sm:$0xff]
  %v454 = vld [vmem:[%s3 + $0x60] sm:$0xff]
  %v455 = vld [vmem:[%s3 + $0x68] sm:$0xff]
  %v456 = vld [vmem:[%s3 + $0x70] sm:$0xff]
  %v457 = vld [vmem:[%s3 + $0x78] sm:$0xff]
  %v458 = vld [vmem:[%s4] sm:$0xff]
  %v459 = vld [vmem:[%s4 + $0x8] sm:$0xff]
  %v460 = vld [vmem:[%s4 + $0x10] sm:$0xff]
  %v461 = vld [vmem:[%s4 + $0x18] sm:$0xff]
  %v462 = vld [vmem:[%s4 + $0x20] sm:$0xff]
  %v463 = vld [vmem:[%s4 + $0x28] sm:$0xff]
  %v464 = vld [vmem:[%s4 + $0x30] sm:$0xff]
  %v465 = vld [vmem:[%s4 + $0x38] sm:$0xff]
  %v466 = vld [vmem:[%s4 + $0x40] sm:$0xff]
  %v467 = vld [vmem:[%s4 + $0x48] sm:$0xff]
  %v468 = vld [vmem:[%s4 + $0x50] sm:$0xff]
  %v469 = vld [vmem:[%s4 + $0x58] sm:$0xff]
  %v470 = vld [vmem:[%s4 + $0x60] sm:$0xff]
  %v471 = vld [vmem:[%s4 + $0x68] sm:$0xff]
  %v472 = vld [vmem:[%s4 + $0x70] sm:$0xff]
  %v473 = vld [vmem:[%s4 + $0x78] sm:$0xff]
  %v474 = vadd.f32 %v348, %v351
  %v475 = vadd.f32 %v474, %v356
  %v476 = vadd.f32 %v475, %v359
  %v477 = vadd.f32 %v476, %v364
  %v478 = vadd.f32 %v477, %v367
  %v479 = vadd.f32 %v478, %v372
  %v480 = vadd.f32 %v479, %v375
  %v481 = vadd.f32 %v480, %v380
  %v482 = vadd.f32 %v481, %v383
  %v483 = vadd.f32 %v482, %v388
  %v484 = vadd.f32 %v483, %v391
  %v485 = vadd.f32 %v484, %v396
  %v486 = vadd.f32 %v485, %v399
  %v487 = vadd.f32 %v486, %v404
  %v488 = vadd.f32 %v487, %v407
  %v489 = vrot.slane %v488, 4
  %v490 = vadd.f32 %v488, %v489
  %v491 = vrot.slane %v490, 2
  %v492 = vadd.f32 %v490, %v491
  %v493 = vrot.slane %v492, 1
  %v494 = vadd.f32 %v492, %v493
  %v495 = vrcp.pop 128.0
  %v496 = vmul.f32 %v494, %v495
  %v497 = vmul.f32 %v348, %v348
  %v498 = vmul.f32 %v351, %v351
  %v499 = vmul.f32 %v356, %v356
  %v500 = vmul.f32 %v359, %v359
  %v501 = vmul.f32 %v364, %v364
  %v502 = vmul.f32 %v367, %v367
  %v503 = vmul.f32 %v372, %v372
  %v504 = vmul.f32 %v375, %v375
  %v505 = vmul.f32 %v380, %v380
  %v506 = vmul.f32 %v383, %v383
  %v507 = vmul.f32 %v388, %v388
  %v508 = vmul.f32 %v391, %v391
  %v509 = vmul.f32 %v396, %v396
  %v510 = vmul.f32 %v399, %v399
  %v511 = vmul.f32 %v404, %v404
  %v512 = vmul.f32 %v407, %v407
  %v513 = vadd.f32 %v497, %v498
  %v514 = vadd.f32 %v513, %v499
  %v515 = vadd.f32 %v514, %v500
  %v516 = vadd.f32 %v515, %v501
  %v517 = vadd.f32 %v516, %v502
  %v518 = vadd.f32 %v517, %v503
  %v519 = vadd.f32 %v518, %v504
  %v520 = vadd.f32 %v519, %v505
  %v521 = vadd.f32 %v520, %v506
  %v522 = vadd.f32 %v521, %v507
  %v523 = vadd.f32 %v522, %v508
  %v524 = vadd.f32 %v523, %v509
  %v525 = vadd.f32 %v524, %v510
  %v526 = vadd.f32 %v525, %v511
  %v527 = vadd.f32 %v526, %v512
  %v528 = vrot.slane %v527, 4
  %v529 = vadd.f32 %v527, %v528
  %v530 = vrot.slane %v529, 2
  %v531 = vadd.f32 %v529, %v530
  %v532 = vrot.slane %v531, 1
  %v533 = vadd.f32 %v531, %v532
  %v534 = vmul.f32 %v533, %v495
  %v535 = vmul.f32 %v496, %v496
  %v536 = vsub.f32 %v534, %v535
  %v537 = vmax.f32 %v536, 0.0
  %v538 = vadd.f32 %v537, 1e-05
  %v539 = vrsqrt.pop %v538
  %v540 = vsub.f32 %v348, %v496
  %v541 = vsub.f32 %v351, %v496
  %v542 = vsub.f32 %v356, %v496
  %v543 = vsub.f32 %v359, %v496
  %v544 = vsub.f32 %v364, %v496
  %v545 = vsub.f32 %v367, %v496
  %v546 = vsub.f32 %v372, %v496
  %v547 = vsub.f32 %v375, %v496
  %v548 = vsub.f32 %v380, %v496
  %v549 = vsub.f32 %v383, %v496
  %v550 = vsub.f32 %v388, %v496
  %v551 = vsub.f32 %v391, %v496
  %v552 = vsub.f32 %v396, %v496
  %v553 = vsub.f32 %v399, %v496
  %v554 = vsub.f32 %v404, %v496
  %v555 = vsub.f32 %v407, %v496
  %v556 = vmul.f32 %v540, %v539
  %v557 = vmul.f32 %v541, %v539
  %v558 = vmul.f32 %v542, %v539
  %v559 = vmul.f32 %v543, %v539
  %v560 = vmul.f32 %v544, %v539
  %v561 = vmul.f32 %v545, %v539
  %v562 = vmul.f32 %v546, %v539
  %v563 = vmul.f32 %v547, %v539
  %v564 = vmul.f32 %v548, %v539
  %v565 = vmul.f32 %v549, %v539
  %v566 = vmul.f32 %v550, %v539
  %v567 = vmul.f32 %v551, %v539
  %v568 = vmul.f32 %v552, %v539
  %v569 = vmul.f32 %v553, %v539
  %v570 = vmul.f32 %v554, %v539
  %v571 = vmul.f32 %v555, %v539
  %573 = vset.pattern.permute.xlu0 0
  %574 = vperm.xlu0 %573, %v442
  %v575 = vpop.permute.xlu0 %574
  %578 = vset.pattern.permute.xlu0 0
  %579 = vperm.xlu0 %578, %v443
  %v580 = vpop.permute.xlu0 %579
  %583 = vset.pattern.permute.xlu0 0
  %584 = vperm.xlu0 %583, %v444
  %v585 = vpop.permute.xlu0 %584
  %588 = vset.pattern.permute.xlu0 0
  %589 = vperm.xlu0 %588, %v445
  %v590 = vpop.permute.xlu0 %589
  %593 = vset.pattern.permute.xlu0 0
  %594 = vperm.xlu0 %593, %v446
  %v595 = vpop.permute.xlu0 %594
  %598 = vset.pattern.permute.xlu0 0
  %599 = vperm.xlu0 %598, %v447
  %v600 = vpop.permute.xlu0 %599
  %603 = vset.pattern.permute.xlu0 0
  %604 = vperm.xlu0 %603, %v448
  %v605 = vpop.permute.xlu0 %604
  %608 = vset.pattern.permute.xlu0 0
  %609 = vperm.xlu0 %608, %v449
  %v610 = vpop.permute.xlu0 %609
  %613 = vset.pattern.permute.xlu0 0
  %614 = vperm.xlu0 %613, %v450
  %v615 = vpop.permute.xlu0 %614
  %618 = vset.pattern.permute.xlu0 0
  %619 = vperm.xlu0 %618, %v451
  %v620 = vpop.permute.xlu0 %619
  %623 = vset.pattern.permute.xlu0 0
  %624 = vperm.xlu0 %623, %v452
  %v625 = vpop.permute.xlu0 %624
  %628 = vset.pattern.permute.xlu0 0
  %629 = vperm.xlu0 %628, %v453
  %v630 = vpop.permute.xlu0 %629
  %633 = vset.pattern.permute.xlu0 0
  %634 = vperm.xlu0 %633, %v454
  %v635 = vpop.permute.xlu0 %634
  %638 = vset.pattern.permute.xlu0 0
  %639 = vperm.xlu0 %638, %v455
  %v640 = vpop.permute.xlu0 %639
  %643 = vset.pattern.permute.xlu0 0
  %644 = vperm.xlu0 %643, %v456
  %v645 = vpop.permute.xlu0 %644
  %648 = vset.pattern.permute.xlu0 0
  %649 = vperm.xlu0 %648, %v457
  %v650 = vpop.permute.xlu0 %649
  %v652 = vmul.f32 %v556, %v575
  %v653 = vmul.f32 %v557, %v580
  %v654 = vmul.f32 %v558, %v585
  %v655 = vmul.f32 %v559, %v590
  %v656 = vmul.f32 %v560, %v595
  %v657 = vmul.f32 %v561, %v600
  %v658 = vmul.f32 %v562, %v605
  %v659 = vmul.f32 %v563, %v610
  %v660 = vmul.f32 %v564, %v615
  %v661 = vmul.f32 %v565, %v620
  %v662 = vmul.f32 %v566, %v625
  %v663 = vmul.f32 %v567, %v630
  %v664 = vmul.f32 %v568, %v635
  %v665 = vmul.f32 %v569, %v640
  %v666 = vmul.f32 %v570, %v645
  %v667 = vmul.f32 %v571, %v650
  %669 = vset.pattern.permute.xlu0 0
  %670 = vperm.xlu0 %669, %v458
  %v671 = vpop.permute.xlu0 %670
  %674 = vset.pattern.permute.xlu0 0
  %675 = vperm.xlu0 %674, %v459
  %v676 = vpop.permute.xlu0 %675
  %679 = vset.pattern.permute.xlu0 0
  %680 = vperm.xlu0 %679, %v460
  %v681 = vpop.permute.xlu0 %680
  %684 = vset.pattern.permute.xlu0 0
  %685 = vperm.xlu0 %684, %v461
  %v686 = vpop.permute.xlu0 %685
  %689 = vset.pattern.permute.xlu0 0
  %690 = vperm.xlu0 %689, %v462
  %v691 = vpop.permute.xlu0 %690
  %694 = vset.pattern.permute.xlu0 0
  %695 = vperm.xlu0 %694, %v463
  %v696 = vpop.permute.xlu0 %695
  %699 = vset.pattern.permute.xlu0 0
  %700 = vperm.xlu0 %699, %v464
  %v701 = vpop.permute.xlu0 %700
  %704 = vset.pattern.permute.xlu0 0
  %705 = vperm.xlu0 %704, %v465
  %v706 = vpop.permute.xlu0 %705
  %709 = vset.pattern.permute.xlu0 0
  %710 = vperm.xlu0 %709, %v466
  %v711 = vpop.permute.xlu0 %710
  %714 = vset.pattern.permute.xlu0 0
  %715 = vperm.xlu0 %714, %v467
  %v716 = vpop.permute.xlu0 %715
  %719 = vset.pattern.permute.xlu0 0
  %720 = vperm.xlu0 %719, %v468
  %v721 = vpop.permute.xlu0 %720
  %724 = vset.pattern.permute.xlu0 0
  %725 = vperm.xlu0 %724, %v469
  %v726 = vpop.permute.xlu0 %725
  %729 = vset.pattern.permute.xlu0 0
  %730 = vperm.xlu0 %729, %v470
  %v731 = vpop.permute.xlu0 %730
  %734 = vset.pattern.permute.xlu0 0
  %735 = vperm.xlu0 %734, %v471
  %v736 = vpop.permute.xlu0 %735
  %739 = vset.pattern.permute.xlu0 0
  %740 = vperm.xlu0 %739, %v472
  %v741 = vpop.permute.xlu0 %740
  %744 = vset.pattern.permute.xlu0 0
  %745 = vperm.xlu0 %744, %v473
  %v746 = vpop.permute.xlu0 %745
  %v748 = vadd.f32 %v652, %v671
  %v749 = vadd.f32 %v653, %v676
  %v750 = vadd.f32 %v654, %v681
  %v751 = vadd.f32 %v655, %v686
  %v752 = vadd.f32 %v656, %v691
  %v753 = vadd.f32 %v657, %v696
  %v754 = vadd.f32 %v658, %v701
  %v755 = vadd.f32 %v659, %v706
  %v756 = vadd.f32 %v660, %v711
  %v757 = vadd.f32 %v661, %v716
  %v758 = vadd.f32 %v662, %v721
  %v759 = vadd.f32 %v663, %v726
  %v760 = vadd.f32 %v664, %v731
  %v761 = vadd.f32 %v665, %v736
  %v762 = vadd.f32 %v666, %v741
  %v763 = vadd.f32 %v667, %v746
  %v764 = vmax.f32 %v748, 0.0
  %v765 = vmax.f32 %v749, 0.0
  %v766 = vmax.f32 %v750, 0.0
  %v767 = vmax.f32 %v751, 0.0
  %v768 = vmax.f32 %v752, 0.0
  %v769 = vmax.f32 %v753, 0.0
  %v770 = vmax.f32 %v754, 0.0
  %v771 = vmax.f32 %v755, 0.0
  %v772 = vmax.f32 %v756, 0.0
  %v773 = vmax.f32 %v757, 0.0
  %v774 = vmax.f32 %v758, 0.0
  %v775 = vmax.f32 %v759, 0.0
  %v776 = vmax.f32 %v760, 0.0
  %v777 = vmax.f32 %v761, 0.0
  %v778 = vmax.f32 %v762, 0.0
  %v779 = vmax.f32 %v763, 0.0
  %v780 = vld [vmem:[%s5] sm:$0xf]
  %v781 = vld [vmem:[%s5 + $0x4] sm:$0xf]
  %v782 = vld [vmem:[%s5 + $0x8] sm:$0xf]
  %v783 = vld [vmem:[%s5 + $0xc] sm:$0xf]
  %v784 = vld [vmem:[%s5 + $0x10] sm:$0xf]
  %v785 = vld [vmem:[%s5 + $0x14] sm:$0xf]
  %v786 = vld [vmem:[%s5 + $0x18] sm:$0xf]
  %v787 = vld [vmem:[%s5 + $0x1c] sm:$0xf]
  %v788 = vpack.c.bf16 %v765, %v764
  %v789 = vpack.c.bf16 %v767, %v766
  %v790 = vpack.c.bf16 %v769, %v768
  %v791 = vpack.c.bf16 %v771, %v770
  %v792 = vpack.c.bf16 %v773, %v772
  %v793 = vpack.c.bf16 %v775, %v774
  %v794 = vpack.c.bf16 %v777, %v776
  %v795 = vpack.c.bf16 %v779, %v778
  %v796 = vld [vmem:[%s6] sm:$0xff]
  %v797 = vld [vmem:[%s6 + $0x8] sm:$0xff]
  %v798 = vld [vmem:[%s6 + $0x10] sm:$0xff]
  %v799 = vld [vmem:[%s6 + $0x18] sm:$0xff]
  %v800 = vld [vmem:[%s6 + $0x20] sm:$0xff]
  %v801 = vld [vmem:[%s6 + $0x28] sm:$0xff]
  %v802 = vld [vmem:[%s6 + $0x30] sm:$0xff]
  %v803 = vld [vmem:[%s6 + $0x38] sm:$0xff]
  %805 = vset.pattern.permute.xlu0 0
  %806 = vperm.xlu0 %805, %v796
  %v807 = vpop.permute.xlu0 %806
  %810 = vset.pattern.permute.xlu0 0
  %811 = vperm.xlu0 %810, %v797
  %v812 = vpop.permute.xlu0 %811
  %815 = vset.pattern.permute.xlu0 0
  %816 = vperm.xlu0 %815, %v798
  %v817 = vpop.permute.xlu0 %816
  %820 = vset.pattern.permute.xlu0 0
  %821 = vperm.xlu0 %820, %v799
  %v822 = vpop.permute.xlu0 %821
  %825 = vset.pattern.permute.xlu0 0
  %826 = vperm.xlu0 %825, %v800
  %v827 = vpop.permute.xlu0 %826
  %830 = vset.pattern.permute.xlu0 0
  %831 = vperm.xlu0 %830, %v801
  %v832 = vpop.permute.xlu0 %831
  %835 = vset.pattern.permute.xlu0 0
  %836 = vperm.xlu0 %835, %v802
  %v837 = vpop.permute.xlu0 %836
  %840 = vset.pattern.permute.xlu0 0
  %841 = vperm.xlu0 %840, %v803
  %v842 = vpop.permute.xlu0 %841
  %v852 = vunpack.c.l.b16 %v780
  %v853 = vunpack.c.l.b16 %v781
  %v854 = vunpack.c.l.b16 %v782
  %v855 = vunpack.c.l.b16 %v783
  %v856 = vunpack.c.l.b16 %v784
  %v857 = vunpack.c.l.b16 %v785
  %v858 = vunpack.c.l.b16 %v786
  %v859 = vunpack.c.l.b16 %v787
  %v860 = vpack.c.b16 %v853, %v852
  %v861 = vpack.c.b16 %v855, %v854
  %v862 = vpack.c.b16 %v857, %v856
  %v863 = vpack.c.b16 %v859, %v858
  %868 = vmatprep.subr.bf16.mxu0 0
  %869 = vmatpush1.bf16.msra.mxu0 %v795
  %870 = vmatprep.subr.bf16.mxu0 0
  %871 = vmatpush1.bf16.msra.mxu0 %v794
  %872 = vmatprep.subr.bf16.mxu0 0
  %873 = vmatpush1.bf16.msra.mxu0 %v793
  %874 = vmatprep.subr.bf16.mxu0 0
  %875 = vmatpush1.bf16.msra.mxu0 %v792
  %876 = vmatprep.subr.bf16.mxu0 0
  %877 = vmatpush1.bf16.msra.mxu0 %v791
  %878 = vmatprep.subr.bf16.mxu0 0
  %879 = vmatpush1.bf16.msra.mxu0 %v790
  %880 = vmatprep.subr.bf16.mxu0 0
  %881 = vmatpush1.bf16.msra.mxu0 %v789
  %882 = vmatprep.subr.bf16.mxu0 0
  %883 = vmatpush1.bf16.msra.mxu0 %v788
  %884 = vmatprep.subr.bf16.mxu0 0
  %885 = vmatpush2.bf16.msra.mxu0 0
  %886 = vmatprep.subr.bf16.mxu0 0
  %887 = vmatpush2.bf16.msra.mxu0 0
  %888 = vmatprep.subr.bf16.mxu0 0
  %889 = vmatpush2.bf16.msra.mxu0 0
  %890 = vmatprep.subr.bf16.mxu0 0
  %891 = vmatpush2.bf16.msra.mxu0 0
  %892 = vmatprep.subr.bf16.mxu0 0
  %893 = vmatpush2.bf16.msra.mxu0 0
  %894 = vmatprep.subr.bf16.mxu0 0
  %895 = vmatpush2.bf16.msra.mxu0 0
  %896 = vmatprep.subr.bf16.mxu0 0
  %897 = vmatpush2.bf16.msra.mxu0 0
  %898 = vmatprep.subr.bf16.mxu0 0
  %899 = vmatpush2.bf16.msra.mxu0 0
  %900 = vmatprep.mubr.bf16.mxu0 0
  %901 = vmatmul.mubr.bf16.gmra.mxu0 %v860
  %v902 = vpop.f32.mrf.mxu0
  %v903 = vadd.f32 %v807, %v902
  %v904 = vpop.f32.mrf.mxu0
  %v905 = vpop.f32.mrf.mxu0
  %v906 = vadd.f32 %v812, %v905
  %v907 = vpop.f32.mrf.mxu0
  %908 = vmatprep.mubr.bf16.mxu0 0
  %909 = vmatmul.mubr.bf16.gmra.mxu0 %v861
  %v910 = vpop.f32.mrf.mxu0
  %v911 = vadd.f32 %v817, %v910
  %v912 = vpop.f32.mrf.mxu0
  %v913 = vpop.f32.mrf.mxu0
  %v914 = vadd.f32 %v822, %v913
  %v915 = vpop.f32.mrf.mxu0
  %916 = vmatprep.mubr.bf16.mxu0 0
  %917 = vmatmul.mubr.bf16.gmra.mxu0 %v862
  %v918 = vpop.f32.mrf.mxu0
  %v919 = vadd.f32 %v827, %v918
  %v920 = vpop.f32.mrf.mxu0
  %v921 = vpop.f32.mrf.mxu0
  %v922 = vadd.f32 %v832, %v921
  %v923 = vpop.f32.mrf.mxu0
  %924 = vmatprep.mubr.bf16.mxu0 0
  %925 = vmatmul.mubr.bf16.gmra.mxu0 %v863
  %v926 = vpop.f32.mrf.mxu0
  %v927 = vadd.f32 %v837, %v926
  %v928 = vpop.f32.mrf.mxu0
  %v929 = vpop.f32.mrf.mxu0
  %v930 = vadd.f32 %v842, %v929
  %v931 = vpop.f32.mrf.mxu0
  %932 = vdwg.mxu0
  %v933 = vld [vmem:[%s7] sm:$0xff]
  %v934 = vld [vmem:[%s7 + $0x8] sm:$0xff]
  %v935 = vld [vmem:[%s7 + $0x10] sm:$0xff]
  %v936 = vld [vmem:[%s7 + $0x18] sm:$0xff]
  %v937 = vld [vmem:[%s7 + $0x20] sm:$0xff]
  %v938 = vld [vmem:[%s7 + $0x28] sm:$0xff]
  %v939 = vld [vmem:[%s7 + $0x30] sm:$0xff]
  %v940 = vld [vmem:[%s7 + $0x38] sm:$0xff]
  %v941 = vld [vmem:[%s8] sm:$0xff]
  %v942 = vld [vmem:[%s8 + $0x8] sm:$0xff]
  %v943 = vld [vmem:[%s8 + $0x10] sm:$0xff]
  %v944 = vld [vmem:[%s8 + $0x18] sm:$0xff]
  %v945 = vld [vmem:[%s8 + $0x20] sm:$0xff]
  %v946 = vld [vmem:[%s8 + $0x28] sm:$0xff]
  %v947 = vld [vmem:[%s8 + $0x30] sm:$0xff]
  %v948 = vld [vmem:[%s8 + $0x38] sm:$0xff]
  %v949 = vadd.f32 %v903, %v906
  %v950 = vadd.f32 %v949, %v911
  %v951 = vadd.f32 %v950, %v914
  %v952 = vadd.f32 %v951, %v919
  %v953 = vadd.f32 %v952, %v922
  %v954 = vadd.f32 %v953, %v927
  %v955 = vadd.f32 %v954, %v930
  %v956 = vrot.slane %v955, 4
  %v957 = vadd.f32 %v955, %v956
  %v958 = vrot.slane %v957, 2
  %v959 = vadd.f32 %v957, %v958
  %v960 = vrot.slane %v959, 1
  %v961 = vadd.f32 %v959, %v960
  %v962 = vrcp.pop 64.0
  %v963 = vmul.f32 %v961, %v962
  %v964 = vmul.f32 %v903, %v903
  %v965 = vmul.f32 %v906, %v906
  %v966 = vmul.f32 %v911, %v911
  %v967 = vmul.f32 %v914, %v914
  %v968 = vmul.f32 %v919, %v919
  %v969 = vmul.f32 %v922, %v922
  %v970 = vmul.f32 %v927, %v927
  %v971 = vmul.f32 %v930, %v930
  %v972 = vadd.f32 %v964, %v965
  %v973 = vadd.f32 %v972, %v966
  %v974 = vadd.f32 %v973, %v967
  %v975 = vadd.f32 %v974, %v968
  %v976 = vadd.f32 %v975, %v969
  %v977 = vadd.f32 %v976, %v970
  %v978 = vadd.f32 %v977, %v971
  %v979 = vrot.slane %v978, 4
  %v980 = vadd.f32 %v978, %v979
  %v981 = vrot.slane %v980, 2
  %v982 = vadd.f32 %v980, %v981
  %v983 = vrot.slane %v982, 1
  %v984 = vadd.f32 %v982, %v983
  %v985 = vmul.f32 %v984, %v962
  %v986 = vmul.f32 %v963, %v963
  %v987 = vsub.f32 %v985, %v986
  %v988 = vmax.f32 %v987, 0.0
  %v989 = vadd.f32 %v988, 1e-05
  %v990 = vrsqrt.pop %v989
  %v991 = vsub.f32 %v903, %v963
  %v992 = vsub.f32 %v906, %v963
  %v993 = vsub.f32 %v911, %v963
  %v994 = vsub.f32 %v914, %v963
  %v995 = vsub.f32 %v919, %v963
  %v996 = vsub.f32 %v922, %v963
  %v997 = vsub.f32 %v927, %v963
  %v998 = vsub.f32 %v930, %v963
  %v999 = vmul.f32 %v991, %v990
  %v1000 = vmul.f32 %v992, %v990
  %v1001 = vmul.f32 %v993, %v990
  %v1002 = vmul.f32 %v994, %v990
  %v1003 = vmul.f32 %v995, %v990
  %v1004 = vmul.f32 %v996, %v990
  %v1005 = vmul.f32 %v997, %v990
  %v1006 = vmul.f32 %v998, %v990
  %1008 = vset.pattern.permute.xlu0 0
  %1009 = vperm.xlu0 %1008, %v933
  %v1010 = vpop.permute.xlu0 %1009
  %1013 = vset.pattern.permute.xlu0 0
  %1014 = vperm.xlu0 %1013, %v934
  %v1015 = vpop.permute.xlu0 %1014
  %1018 = vset.pattern.permute.xlu0 0
  %1019 = vperm.xlu0 %1018, %v935
  %v1020 = vpop.permute.xlu0 %1019
  %1023 = vset.pattern.permute.xlu0 0
  %1024 = vperm.xlu0 %1023, %v936
  %v1025 = vpop.permute.xlu0 %1024
  %1028 = vset.pattern.permute.xlu0 0
  %1029 = vperm.xlu0 %1028, %v937
  %v1030 = vpop.permute.xlu0 %1029
  %1033 = vset.pattern.permute.xlu0 0
  %1034 = vperm.xlu0 %1033, %v938
  %v1035 = vpop.permute.xlu0 %1034
  %1038 = vset.pattern.permute.xlu0 0
  %1039 = vperm.xlu0 %1038, %v939
  %v1040 = vpop.permute.xlu0 %1039
  %1043 = vset.pattern.permute.xlu0 0
  %1044 = vperm.xlu0 %1043, %v940
  %v1045 = vpop.permute.xlu0 %1044
  %v1047 = vmul.f32 %v999, %v1010
  %v1048 = vmul.f32 %v1000, %v1015
  %v1049 = vmul.f32 %v1001, %v1020
  %v1050 = vmul.f32 %v1002, %v1025
  %v1051 = vmul.f32 %v1003, %v1030
  %v1052 = vmul.f32 %v1004, %v1035
  %v1053 = vmul.f32 %v1005, %v1040
  %v1054 = vmul.f32 %v1006, %v1045
  %1056 = vset.pattern.permute.xlu0 0
  %1057 = vperm.xlu0 %1056, %v941
  %v1058 = vpop.permute.xlu0 %1057
  %1061 = vset.pattern.permute.xlu0 0
  %1062 = vperm.xlu0 %1061, %v942
  %v1063 = vpop.permute.xlu0 %1062
  %1066 = vset.pattern.permute.xlu0 0
  %1067 = vperm.xlu0 %1066, %v943
  %v1068 = vpop.permute.xlu0 %1067
  %1071 = vset.pattern.permute.xlu0 0
  %1072 = vperm.xlu0 %1071, %v944
  %v1073 = vpop.permute.xlu0 %1072
  %1076 = vset.pattern.permute.xlu0 0
  %1077 = vperm.xlu0 %1076, %v945
  %v1078 = vpop.permute.xlu0 %1077
  %1081 = vset.pattern.permute.xlu0 0
  %1082 = vperm.xlu0 %1081, %v946
  %v1083 = vpop.permute.xlu0 %1082
  %1086 = vset.pattern.permute.xlu0 0
  %1087 = vperm.xlu0 %1086, %v947
  %v1088 = vpop.permute.xlu0 %1087
  %1091 = vset.pattern.permute.xlu0 0
  %1092 = vperm.xlu0 %1091, %v948
  %v1093 = vpop.permute.xlu0 %1092
  %v1095 = vadd.f32 %v1047, %v1058
  %v1096 = vadd.f32 %v1048, %v1063
  %v1097 = vadd.f32 %v1049, %v1068
  %v1098 = vadd.f32 %v1050, %v1073
  %v1099 = vadd.f32 %v1051, %v1078
  %v1100 = vadd.f32 %v1052, %v1083
  %v1101 = vadd.f32 %v1053, %v1088
  %v1102 = vadd.f32 %v1054, %v1093
  %v1103 = vmax.f32 %v412, 0.0
  %v1104 = vmax.f32 %v415, 0.0
  %v1105 = vmax.f32 %v420, 0.0
  %v1106 = vmax.f32 %v423, 0.0
  %v1107 = vmax.f32 %v428, 0.0
  %v1108 = vmax.f32 %v431, 0.0
  %v1109 = vmax.f32 %v436, 0.0
  %v1110 = vmax.f32 %v439, 0.0
  %v1111 = vadd.f32 %v1095, %v1103
  %v1112 = vadd.f32 %v1096, %v1104
  %v1113 = vadd.f32 %v1097, %v1105
  %v1114 = vadd.f32 %v1098, %v1106
  %v1115 = vadd.f32 %v1099, %v1107
  %v1116 = vadd.f32 %v1100, %v1108
  %v1117 = vadd.f32 %v1101, %v1109
  %v1118 = vadd.f32 %v1102, %v1110
  %v1119 = vmax.f32 %v1111, 0.0
  %v1120 = vmax.f32 %v1112, 0.0
  %v1121 = vmax.f32 %v1113, 0.0
  %v1122 = vmax.f32 %v1114, 0.0
  %v1123 = vmax.f32 %v1115, 0.0
  %v1124 = vmax.f32 %v1116, 0.0
  %v1125 = vmax.f32 %v1117, 0.0
  %v1126 = vmax.f32 %v1118, 0.0
  %v1127 = vld [vmem:[%s9] sm:$0xff]
  %v1128 = vld [vmem:[%s9 + $0x8] sm:$0xff]
  %v1129 = vld [vmem:[%s9 + $0x10] sm:$0xff]
  %v1130 = vld [vmem:[%s9 + $0x18] sm:$0xff]
  %v1131 = vld [vmem:[%s9 + $0x20] sm:$0xff]
  %v1132 = vld [vmem:[%s9 + $0x28] sm:$0xff]
  %v1133 = vld [vmem:[%s9 + $0x30] sm:$0xff]
  %v1134 = vld [vmem:[%s9 + $0x38] sm:$0xff]
  %1136 = vset.pattern.permute.xlu0 0
  %1137 = vperm.xlu0 %1136, %v1127
  %v1138 = vpop.permute.xlu0 %1137
  %1141 = vset.pattern.permute.xlu0 0
  %1142 = vperm.xlu0 %1141, %v1128
  %v1143 = vpop.permute.xlu0 %1142
  %1146 = vset.pattern.permute.xlu0 0
  %1147 = vperm.xlu0 %1146, %v1129
  %v1148 = vpop.permute.xlu0 %1147
  %1151 = vset.pattern.permute.xlu0 0
  %1152 = vperm.xlu0 %1151, %v1130
  %v1153 = vpop.permute.xlu0 %1152
  %1156 = vset.pattern.permute.xlu0 0
  %1157 = vperm.xlu0 %1156, %v1131
  %v1158 = vpop.permute.xlu0 %1157
  %1161 = vset.pattern.permute.xlu0 0
  %1162 = vperm.xlu0 %1161, %v1132
  %v1163 = vpop.permute.xlu0 %1162
  %1166 = vset.pattern.permute.xlu0 0
  %1167 = vperm.xlu0 %1166, %v1133
  %v1168 = vpop.permute.xlu0 %1167
  %1171 = vset.pattern.permute.xlu0 0
  %1172 = vperm.xlu0 %1171, %v1134
  %v1173 = vpop.permute.xlu0 %1172
  %v1175 = vmul.f32 %v1119, %v1138
  %v1176 = vmul.f32 %v1120, %v1143
  %v1177 = vmul.f32 %v1121, %v1148
  %v1178 = vmul.f32 %v1122, %v1153
  %v1179 = vmul.f32 %v1123, %v1158
  %v1180 = vmul.f32 %v1124, %v1163
  %v1181 = vmul.f32 %v1125, %v1168
  %v1182 = vmul.f32 %v1126, %v1173
  %v1183 = vadd.f32 %v1175, %v1176
  %v1184 = vadd.f32 %v1183, %v1177
  %v1185 = vadd.f32 %v1184, %v1178
  %v1186 = vadd.f32 %v1185, %v1179
  %v1187 = vadd.f32 %v1186, %v1180
  %v1188 = vadd.f32 %v1187, %v1181
  %v1189 = vadd.f32 %v1188, %v1182
  %v1190 = vrot.slane %v1189, 4
  %v1191 = vadd.f32 %v1189, %v1190
  %v1192 = vrot.slane %v1191, 2
  %v1193 = vadd.f32 %v1191, %v1192
  %v1194 = vrot.slane %v1193, 1
  %v1195 = vadd.f32 %v1193, %v1194
  %v1196 = vld [vmem:[#allocation2] sm:$0x1]
  %1198 = vset.pattern.permute.xlu0 0
  %1199 = vperm.xlu0 %1198, %v1196
  %v1200 = vpop.permute.xlu0 %1199
  %v1202 = vlaneseq
  %v1203 = vshrl.u32 %v1202, 7
  %v1204 = vsub.s32 0, %v1203
  %v1205 = vrot.slane %v1200, %v1204
  %v1206 = vadd.f32 %v1195, %v1205
  %1207 = vst [vmem:[%s11] sm:$0x1] %v1206
  // Predicated region
  $region46: #{critic_forward.1} parent=0 // pred_check
    _
  $region47: #{critic_forward.1} parent=0 // pred_check_branch
    %1209 = sbr.rel (0) target = $region49
  $region48: #{critic_forward.1} parent=0 // pred_region
    _
  $region49: #{critic_forward.1} parent=0 // pred_fallthru
    _
  // Predicated region
  $region50: #{critic_forward.1} parent=0 // pred_check
    _
  $region51: #{critic_forward.1} parent=0 // pred_check_branch
    %1211 = sbr.rel (0) target = $region53
  $region52: #{critic_forward.1} parent=0 // pred_region
    _
  $region53: #{critic_forward.1} parent=0 // pred_fallthru
    _

</llo_original>
